<compile_context>
chip_gen: v5e
topology: v5e:2x2
jax: 0.10.0
libtpu: 0.0.40
codegen_flags: <defaults>
</compile_context>

<pallas_src>
import jax
import jax.numpy as jnp
from jax.experimental import pallas as pl
from jax.experimental.pallas import tpu as pltpu

_LANES = 128   # lane-dense fused-classifier width / output slab width
_TB = 16       # passages per grid step (bf16 sublane tile = 16)


def _softmax_last(z):
    m = jnp.max(z, axis=-1, keepdims=True)
    e = jnp.exp(z - m)
    return e / jnp.sum(e, axis=-1, keepdims=True)


def _dpr_reader_kernel(x_ref, w_enc_ref, b_enc_ref, w_out_ref, b_out_ref, out_ref):
    """One grid step = _TB passages.

    x_ref    : [2, TB, H] bf16   row 0 = seq pos 0 (CLS), row 1 = seq pos 1
    w_enc_ref: [H, H]     bf16   stand-in encoder weight (VMEM-resident)
    b_enc_ref: [1, H]     f32
    w_out_ref: [H, 128]   bf16   cols 0:2 = span classifier, col 2 = selected
    b_out_ref: [1, 128]   f32
    out_ref  : [TB, 128]  f32    cols 0:2 start, 2:4 end, 4 selected
    """
    tb = out_ref.shape[0]

    # Stack the two sequence positions so each contraction is one M=2*TB matmul.
    x_all = jnp.concatenate([x_ref[0], x_ref[1]], axis=0)            # [2*TB, H] bf16

    # Stand-in encoder: bf16 matmul, f32 accumulation, f32 tanh (EUP).
    enc = jnp.tanh(
        jnp.dot(x_all, w_enc_ref[...], preferred_element_type=jnp.float32)
        + b_enc_ref[...])                                            # [2*TB, H] f32

    # Fused span + selected classifiers: single lane-dense (H,128) weight, so
    # the tiny N=2 / N=1 projections share one MXU pass.
    logits = (jnp.dot(enc.astype(jnp.bfloat16), w_out_ref[...],
                      preferred_element_type=jnp.float32)
              + b_out_ref[...])                                      # [2*TB, 128] f32

    start = _softmax_last(logits[:tb, 0:2])                          # [TB, 2]
    end = _softmax_last(logits[tb:, 0:2])                            # [TB, 2]

    # One lane-dense full-block store, then drop the small results in place.
    out_ref[...] = jnp.zeros_like(out_ref)
    out_ref[:, 0:2] = start
    out_ref[:, 2:4] = end
    # softmax over the size-1 selected-logit axis is identically 1.0
    out_ref[:, 4:5] = jnp.ones((tb, 1), jnp.float32)


def dpr_reader_forward(x, params):
    """x: [num_passages, seq_len, hidden] f32."""
    B, S, H = x.shape
    assert S >= 2, "need at least two sequence positions"

    # Only sequence positions 0 and 1 feed any output -> DMA just those rows.
    xs = jnp.stack([x[:, 0, :], x[:, 1, :]], axis=0).astype(jnp.bfloat16)  # [2, B, H]

    # Pad passages up to a multiple of the tile (bf16 sublane tile = 16).
    Bp = ((B + _TB - 1) // _TB) * _TB
    if Bp != B:
        xs = jnp.pad(xs, ((0, 0), (0, Bp - B), (0, 0)))

    # Fuse span (H,2) and selected (H,1) classifiers into one zero-padded,
    # lane-dense (H, 128) weight; biases likewise.
    w_out = jnp.zeros((H, _LANES), jnp.float32)
    w_out = w_out.at[:, 0:2].set(params["w_span"])
    w_out = w_out.at[:, 2:3].set(params["w_sel"])
    b_out = jnp.zeros((1, _LANES), jnp.float32)
    b_out = b_out.at[:, 0:2].set(params["b_span"])
    b_out = b_out.at[:, 2:3].set(params["b_sel"])

    w_enc = params["w_enc"].astype(jnp.bfloat16)
    b_enc = params["b_enc"].astype(jnp.float32)
    w_out = w_out.astype(jnp.bfloat16)

    out = pl.pallas_call(
        _dpr_reader_kernel,
        out_shape=jax.ShapeDtypeStruct((Bp, _LANES), jnp.float32),
        grid=(Bp // _TB,),
        in_specs=[
            pl.BlockSpec((2, _TB, H), lambda i: (0, i, 0)),    # x tile (pipelined)
            pl.BlockSpec((H, H), lambda i: (0, 0)),            # w_enc (resident)
            pl.BlockSpec((1, H), lambda i: (0, 0)),            # b_enc (resident)
            pl.BlockSpec((H, _LANES), lambda i: (0, 0)),       # fused classifier W
            pl.BlockSpec((1, _LANES), lambda i: (0, 0)),       # fused classifier b
        ],
        out_specs=pl.BlockSpec((_TB, _LANES), lambda i: (i, 0)),
        compiler_params=pltpu.CompilerParams(
            dimension_semantics=("parallel",),                 # split passages across TCs
            vmem_limit_bytes=64 * 1024 * 1024),
    )(xs, w_enc, b_enc, w_out, b_out)

    return {
        "start_token": out[:B, 0:2],
        "end_token": out[:B, 2:4],
        "selected_passage_token": out[:B, 4:5],
    }


def _reference_forward(x, p):
    """Plain-JAX reference using the same bf16-matmul / f32-accumulate path."""
    xb = x.astype(jnp.bfloat16)
    enc = jnp.tanh(
        jnp.einsum("bsh,hk->bsk", xb, p["w_enc"].astype(jnp.bfloat16),
                   preferred_element_type=jnp.float32) + p["b_enc"])
    encb = enc.astype(jnp.bfloat16)
    logits = jnp.einsum("bsh,hk->bsk", encb, p["w_span"].astype(jnp.bfloat16),
                        preferred_element_type=jnp.float32) + p["b_span"]
    start = jax.nn.softmax(logits[:, 0, :], axis=-1)
    end = jax.nn.softmax(logits[:, 1, :], axis=-1)
    sel = jax.nn.softmax(
        jnp.dot(encb[:, 0, :], p["w_sel"].astype(jnp.bfloat16),
                preferred_element_type=jnp.float32) + p["b_sel"], axis=-1)
    return {"start_token": start, "end_token": end, "selected_passage_token": sel}


if __name__ == "__main__":
    # 24 sampled passages (the module default), short seq, hidden = 128 (lane tile).
    B, S, H = 24, 8, 128
    key = jax.random.PRNGKey(0)
    kx, k1, k2, k3, k4, k5, k6 = jax.random.split(key, 7)

    x = jax.random.normal(kx, (B, S, H), dtype=jnp.float32)
    params = {
        "w_enc": 0.05 * jax.random.normal(k1, (H, H), dtype=jnp.float32),
        "b_enc": 0.05 * jax.random.normal(k2, (1, H), dtype=jnp.float32),
        "w_span": 0.05 * jax.random.normal(k3, (H, 2), dtype=jnp.float32),
        "b_span": 0.05 * jax.random.normal(k4, (1, 2), dtype=jnp.float32),
        "w_sel": 0.05 * jax.random.normal(k5, (H, 1), dtype=jnp.float32),
        "b_sel": 0.05 * jax.random.normal(k6, (1, 1), dtype=jnp.float32),
    }

    out = dpr_reader_forward(x, params)
    jax.block_until_ready(out)

    ref = _reference_forward(x, params)
    for k in out:
        assert out[k].shape == ref[k].shape, (k, out[k].shape, ref[k].shape)
        assert jnp.allclose(out[k], ref[k], atol=2e-3, rtol=2e-3), (
            k, float(jnp.max(jnp.abs(out[k] - ref[k]))))

    print("KERNEL_OK")
</pallas_src>

<mosaic_0001>
module attributes {stable_mosaic.version = 11 : i64} {
  func.func @_dpr_reader_kernel(%arg0: i32, %arg1: memref<2x16x128xbf16, #tpu.memory_space<vmem>>, %arg2: memref<128x128xbf16, #tpu.memory_space<vmem>>, %arg3: memref<1x128xf32, #tpu.memory_space<vmem>>, %arg4: memref<128x128xbf16, #tpu.memory_space<vmem>>, %arg5: memref<1x128xf32, #tpu.memory_space<vmem>>, %arg6: memref<16x128xf32, #tpu.memory_space<vmem>>) attributes {dimension_semantics = [#tpu.dimension_semantics<parallel>], iteration_bounds = array<i64: 2>, scalar_prefetch = 0 : i64, scratch_operands = 0 : i64, tpu.core_type = #tpu.core_type<tc>, window_params = [{transform_indices = @transform_0, window_bounds = array<i64: 2, 16, 128>}, {pipeline_mode = #tpu.pipeline_mode<synchronous>, transform_indices = @transform_1, window_bounds = array<i64: 128, 128>}, {pipeline_mode = #tpu.pipeline_mode<synchronous>, transform_indices = @transform_2, window_bounds = array<i64: 1, 128>}, {pipeline_mode = #tpu.pipeline_mode<synchronous>, transform_indices = @transform_3, window_bounds = array<i64: 128, 128>}, {pipeline_mode = #tpu.pipeline_mode<synchronous>, transform_indices = @transform_4, window_bounds = array<i64: 1, 128>}, {transform_indices = @transform_5, window_bounds = array<i64: 16, 128>}]} {
    %c0 = arith.constant 0 : index
    %c0_0 = arith.constant 0 : index
    %c0_1 = arith.constant 0 : index
    %0 = vector.load %arg1[%c0, %c0_0, %c0_1] : memref<2x16x128xbf16, #tpu.memory_space<vmem>>, vector<1x16x128xbf16>
    %1 = vector.shape_cast %0 : vector<1x16x128xbf16> to vector<16x128xbf16>
    %c1 = arith.constant 1 : index
    %c0_2 = arith.constant 0 : index
    %c0_3 = arith.constant 0 : index
    %2 = vector.load %arg1[%c1, %c0_2, %c0_3] : memref<2x16x128xbf16, #tpu.memory_space<vmem>>, vector<1x16x128xbf16>
    %3 = vector.shape_cast %2 : vector<1x16x128xbf16> to vector<16x128xbf16>
    %4 = tpu.concatenate %1, %3 in 0 : vector<16x128xbf16>, vector<16x128xbf16> -> vector<32x128xbf16>
    %c0_4 = arith.constant 0 : index
    %c0_5 = arith.constant 0 : index
    %5 = vector.load %arg2[%c0_4, %c0_5] : memref<128x128xbf16, #tpu.memory_space<vmem>>, vector<128x128xbf16>
    %cst = arith.constant dense<0.000000e+00> : vector<32x128xf32>
    %6 = tpu.matmul %4, %5, %cst {dimension_numbers = #tpu.dot_dimension_numbers<[1], [0], [0], [1], [0, 0, 1, 1], [], []>} : vector<32x128xbf16>, vector<128x128xbf16>, vector<32x128xf32> -> vector<32x128xf32>
    %c0_6 = arith.constant 0 : index
    %c0_7 = arith.constant 0 : index
    %7 = vector.load %arg3[%c0_6, %c0_7] : memref<1x128xf32, #tpu.memory_space<vmem>>, vector<1x128xf32>
    %8 = vector.broadcast %7 : vector<1x128xf32> to vector<32x128xf32>
    %9 = arith.addf %6, %8 : vector<32x128xf32>
    %10 = math.tanh %9 : vector<32x128xf32>
    %11 = arith.truncf %10 : vector<32x128xf32> to vector<32x128xbf16>
    %c0_8 = arith.constant 0 : index
    %c0_9 = arith.constant 0 : index
    %12 = vector.load %arg4[%c0_8, %c0_9] : memref<128x128xbf16, #tpu.memory_space<vmem>>, vector<128x128xbf16>
    %cst_10 = arith.constant dense<0.000000e+00> : vector<32x128xf32>
    %13 = tpu.matmul %11, %12, %cst_10 {dimension_numbers = #tpu.dot_dimension_numbers<[1], [0], [0], [1], [0, 0, 1, 1], [], []>} : vector<32x128xbf16>, vector<128x128xbf16>, vector<32x128xf32> -> vector<32x128xf32>
    %c0_11 = arith.constant 0 : index
    %c0_12 = arith.constant 0 : index
    %14 = vector.load %arg5[%c0_11, %c0_12] : memref<1x128xf32, #tpu.memory_space<vmem>>, vector<1x128xf32>
    %15 = vector.broadcast %14 : vector<1x128xf32> to vector<32x128xf32>
    %16 = arith.addf %13, %15 : vector<32x128xf32>
    %17 = vector.extract_strided_slice %16 {offsets = [0, 0], sizes = [16, 2], strides = [1, 1]} : vector<32x128xf32> to vector<16x2xf32>
    %cst_13 = arith.constant dense<0xFF800000> : vector<16xf32>
    %18 = vector.multi_reduction <maximumf>, %17, %cst_13 [1] : vector<16x2xf32> to vector<16xf32>
    %19 = vector.shape_cast %18 : vector<16xf32> to vector<16x1xf32>
    %20 = vector.broadcast %19 : vector<16x1xf32> to vector<16x2xf32>
    %21 = arith.subf %17, %20 : vector<16x2xf32>
    %22 = math.exp %21 : vector<16x2xf32>
    %cst_14 = arith.constant dense<0.000000e+00> : vector<16xf32>
    %23 = vector.multi_reduction <add>, %22, %cst_14 [1] : vector<16x2xf32> to vector<16xf32>
    %24 = vector.shape_cast %23 : vector<16xf32> to vector<16x1xf32>
    %25 = vector.broadcast %24 : vector<16x1xf32> to vector<16x2xf32>
    %26 = arith.divf %22, %25 : vector<16x2xf32>
    %27 = vector.extract_strided_slice %16 {offsets = [16, 0], sizes = [16, 2], strides = [1, 1]} : vector<32x128xf32> to vector<16x2xf32>
    %cst_15 = arith.constant dense<0xFF800000> : vector<16xf32>
    %28 = vector.multi_reduction <maximumf>, %27, %cst_15 [1] : vector<16x2xf32> to vector<16xf32>
    %29 = vector.shape_cast %28 : vector<16xf32> to vector<16x1xf32>
    %30 = vector.broadcast %29 : vector<16x1xf32> to vector<16x2xf32>
    %31 = arith.subf %27, %30 : vector<16x2xf32>
    %32 = math.exp %31 : vector<16x2xf32>
    %cst_16 = arith.constant dense<0.000000e+00> : vector<16xf32>
    %33 = vector.multi_reduction <add>, %32, %cst_16 [1] : vector<16x2xf32> to vector<16xf32>
    %34 = vector.shape_cast %33 : vector<16xf32> to vector<16x1xf32>
    %35 = vector.broadcast %34 : vector<16x1xf32> to vector<16x2xf32>
    %36 = arith.divf %32, %35 : vector<16x2xf32>
    %cst_17 = arith.constant 0.000000e+00 : f32
    %37 = vector.broadcast %cst_17 : f32 to vector<16x128xf32>
    %c0_18 = arith.constant 0 : index
    %c0_19 = arith.constant 0 : index
    %38 = vector.load %arg6[%c0_18, %c0_19] : memref<16x128xf32, #tpu.memory_space<vmem>>, vector<16x128xf32>
    tpu.vector_store %arg6[%c0_18, %c0_19], %37 {strides = array<i32>} : memref<16x128xf32, #tpu.memory_space<vmem>>, vector<16x128xf32>,
    %c0_20 = arith.constant 0 : index
    %c0_21 = arith.constant 0 : index
    %39 = vector.load %arg6[%c0_20, %c0_21] : memref<16x128xf32, #tpu.memory_space<vmem>>, vector<16x2xf32>
    tpu.vector_store %arg6[%c0_20, %c0_21], %26 {strides = array<i32>} : memref<16x128xf32, #tpu.memory_space<vmem>>, vector<16x2xf32>,
    %c0_22 = arith.constant 0 : index
    %c2 = arith.constant 2 : index
    %40 = vector.load %arg6[%c0_22, %c2] : memref<16x128xf32, #tpu.memory_space<vmem>>, vector<16x2xf32>
    tpu.vector_store %arg6[%c0_22, %c2], %36 {strides = array<i32>} : memref<16x128xf32, #tpu.memory_space<vmem>>, vector<16x2xf32>,
    %cst_23 = arith.constant 1.000000e+00 : f32
    %41 = vector.broadcast %cst_23 : f32 to vector<16x1xf32>
    %c0_24 = arith.constant 0 : index
    %c4 = arith.constant 4 : index
    %42 = vector.load %arg6[%c0_24, %c4] : memref<16x128xf32, #tpu.memory_space<vmem>>, vector<16x1xf32>
    tpu.vector_store %arg6[%c0_24, %c4], %41 {strides = array<i32>} : memref<16x128xf32, #tpu.memory_space<vmem>>, vector<16x1xf32>,
    return
  }
  func.func @transform_0(%arg0: i32) -> (i32, i32, i32) {
    %c0_i32 = arith.constant 0 : i32
    %c0_i32_0 = arith.constant 0 : i32
    %c0_i32_1 = arith.constant 0 : i32
    return %c0_i32, %arg0, %c0_i32_0 : i32, i32, i32
  }
  func.func @transform_1(%arg0: i32) -> (i32, i32) {
    %c0_i32 = arith.constant 0 : i32
    %c0_i32_0 = arith.constant 0 : i32
    %c0_i32_1 = arith.constant 0 : i32
    return %c0_i32, %c0_i32_0 : i32, i32
  }
  func.func @transform_2(%arg0: i32) -> (i32, i32) {
    %c0_i32 = arith.constant 0 : i32
    %c0_i32_0 = arith.constant 0 : i32
    %c0_i32_1 = arith.constant 0 : i32
    return %c0_i32, %c0_i32_0 : i32, i32
  }
  func.func @transform_3(%arg0: i32) -> (i32, i32) {
    %c0_i32 = arith.constant 0 : i32
    %c0_i32_0 = arith.constant 0 : i32
    %c0_i32_1 = arith.constant 0 : i32
    return %c0_i32, %c0_i32_0 : i32, i32
  }
  func.func @transform_4(%arg0: i32) -> (i32, i32) {
    %c0_i32 = arith.constant 0 : i32
    %c0_i32_0 = arith.constant 0 : i32
    %c0_i32_1 = arith.constant 0 : i32
    return %c0_i32, %c0_i32_0 : i32, i32
  }
  func.func @transform_5(%arg0: i32) -> (i32, i32) {
    %c0_i32 = arith.constant 0 : i32
    %c0_i32_0 = arith.constant 0 : i32
    return %arg0, %c0_i32 : i32, i32
  }
}

</mosaic_0001>

<llo_original>
// kernel: tpu_custom_call.1
$region0: #{tpu_custom_call.1}
  #allocation0 [shape = 'u32[]', space=smem, size = 0x4, offset = 0x4, fixed_abs, tag = 'smem constant byte address 0x4 - core index']
  #allocation1 [shape = 'u32[72,128]{1,0:T(1,128)}', space=vmem, size = 0x9000, scoped, tag = 'internal scratch']
  #allocation9 [shape = 's32[]', space=sflag, size = 0x4, offset = 0, fixed_abs, tag = 'sflag constant byte address 0x0 - dummy sync flag']
  %s0 = inlined_call_operand.hbm [shape: bf16[2,32,128], index: 0, kind: input, shape index: {}]
  %s1 = inlined_call_operand.hbm [shape: bf16[128,128], index: 1, kind: input, shape index: {}]
  %s2 = inlined_call_operand.vmem [shape: f32[1,128], index: 2, kind: input, shape index: {}]
  %s3 = inlined_call_operand.hbm [shape: bf16[128,128], index: 3, kind: input, shape index: {}]
  %s4 = inlined_call_operand.vmem [shape: f32[1,128], index: 4, kind: input, shape index: {}]
  %s5 = inlined_call_operand.hbm [shape: f32[32,128], index: 5, kind: output, shape index: {}]
  %s6 = sld [smem:[#allocation0]]
  $region65: #{tpu_custom_call.1} parent=0
    _
  %s8 = ssub.s32 1, %s6
  %s9 = scalar_select 0, %s8, %s6
  $region1: #{tpu_custom_call.1} parent=0
    #allocation2 [shape = 'u8[16384]{0}', space=vmem, size = 0x4000, scoped, tag = 'input window, operand 0']
    #allocation3 [shape = 's32[2]{0}', space=sflag, size = 0x8, scoped, tag = 'scoped memory for tpu_custom_call.1']
    #allocation4 [shape = 's32[2]{0}', space=sflag, size = 0x8, scoped, tag = 'scoped memory for tpu_custom_call.1']
    #allocation5 [shape = 'u8[32768]{0}', space=vmem, size = 0x8000, scoped, tag = 'input window, operand 1, single buffered']
    #allocation6 [shape = 's32[1]{0}', space=sflag, size = 0x4, scoped, tag = 'scoped memory for tpu_custom_call.1']
    #allocation7 [shape = 'u8[32768]{0}', space=vmem, size = 0x8000, scoped, tag = 'input window, operand 3, single buffered']
    #allocation8 [shape = 'u8[16384]{0}', space=vmem, size = 0x4000, scoped, tag = 'output window, operand 0']
    %10 = vsyncpa [#allocation3], 0
    %s11 = scalar_lea.sflag [#allocation3], 1
    %12 = vsyncpa %s11, 0
    %13 = vsyncpa [#allocation6], 0
    %14 = vsyncpa [#allocation4], 0
    %s15 = scalar_lea.sflag [#allocation4], 1
    %16 = vsyncpa %s15, 0
    loop: start=0, step=1, limit=4
    $region2: #{tpu_custom_call.1} parent=1 // loop_pre_header
      _
    $region3: #{tpu_custom_call.1} parent=1 // loop_header
      %s18 = sphi 0, %s22
      %p19 = scmp.ge.s32.totalorder %s18, 4
      %s28 = sphi 0, %s30
      %s31 = sphi 0, %s28
      %s32 = sphi 0, %s31
      %s48 = sphi 0, %s32
      %s52 = sphi 0, %s52
      %s54 = sphi 0, %s52
      %s55 = sphi 0, %s54
      %s69 = sphi 0, %s55
      %s73 = sphi 0, %s73
      %s75 = sphi 0, %s73
      %s76 = sphi 0, %s75
      %s90 = sphi 0, %s76
      %s94 = sphi 0, %s94
      %s96 = sphi 0, %s94
      %s97 = sphi 0, %s96
      %s111 = sphi 0, %s97
      %s115 = sphi 0, %s115
      %s117 = sphi 0, %s115
      %s118 = sphi 0, %s117
      %s132 = sphi 0, %s118
      %s138 = sphi 0, %s140
      %s141 = sphi 0, %s138
      %s142 = sphi 0, %s141
      %s158 = sphi 0, %s142
    $region4: #{tpu_custom_call.1} parent=1 // loop_header_branch
      %21 = sbr.rel (%p19) target = $region8
    $region5: #{tpu_custom_call.1} parent=1 // loop_body
      %s23 = ssub.s32 %s18, 1
      %s24 = ssub.s32 %s18, 2
      %s25 = sadd.s32 %s18, 1
      %s26 = ssub.s32 %s18, %s25
      %p27 = scmp.eq.s32.totalorder %s26, 0
      %s29 = sadd.s32 %s28, 1
      %s30 = scalar_select %p27, %s28, %s29
      %p33 = pneg %p27
      %p34 = scmp.eq.s32.totalorder %s18, 1
      %p35 = por %p33, %p34
      %p36 = scmp.ne.s32.totalorder %s28, %s31
      %p37 = scmp.eq.s32.totalorder %s18, 0
      %p38 = por %p36, %p37
      %p39 = scmp.ne.s32.totalorder %s28, %s31
      %p40 = scmp.eq.s32.totalorder %s23, 1
      %p41 = por %p39, %p40
      %p42 = scmp.ne.s32.totalorder %s31, %s32
      %p43 = scmp.eq.s32.totalorder %s23, 0
      %p44 = por %p42, %p43
      %p45 = scmp.ne.s32.totalorder %s31, %s32
      %p46 = scmp.eq.s32.totalorder %s24, 1
      %p47 = por %p45, %p46
      %p49 = scmp.ne.s32.totalorder %s32, %s48
      %p50 = scmp.eq.s32.totalorder %s24, 0
      %p51 = por %p49, %p50
      %s53 = sadd.s32 %s52, 1
      %p56 = scmp.eq.s32.totalorder %s18, 1
      %p57 = scmp.ne.s32.totalorder %s52, %s54
      %p58 = scmp.eq.s32.totalorder %s18, 0
      %p59 = por %p57, %p58
      %p60 = scmp.ne.s32.totalorder %s52, %s54
      %p61 = scmp.eq.s32.totalorder %s23, 1
      %p62 = por %p60, %p61
      %p63 = scmp.ne.s32.totalorder %s54, %s55
      %p64 = scmp.eq.s32.totalorder %s23, 0
      %p65 = por %p63, %p64
      %p66 = scmp.ne.s32.totalorder %s54, %s55
      %p67 = scmp.eq.s32.totalorder %s24, 1
      %p68 = por %p66, %p67
      %p70 = scmp.ne.s32.totalorder %s55, %s69
      %p71 = scmp.eq.s32.totalorder %s24, 0
      %p72 = por %p70, %p71
      %s74 = sadd.s32 %s73, 1
      %p77 = scmp.eq.s32.totalorder %s18, 1
      %p78 = scmp.ne.s32.totalorder %s73, %s75
      %p79 = scmp.eq.s32.totalorder %s18, 0
      %p80 = por %p78, %p79
      %p81 = scmp.ne.s32.totalorder %s73, %s75
      %p82 = scmp.eq.s32.totalorder %s23, 1
      %p83 = por %p81, %p82
      %p84 = scmp.ne.s32.totalorder %s75, %s76
      %p85 = scmp.eq.s32.totalorder %s23, 0
      %p86 = por %p84, %p85
      %p87 = scmp.ne.s32.totalorder %s75, %s76
      %p88 = scmp.eq.s32.totalorder %s24, 1
      %p89 = por %p87, %p88
      %p91 = scmp.ne.s32.totalorder %s76, %s90
      %p92 = scmp.eq.s32.totalorder %s24, 0
      %p93 = por %p91, %p92
      %s95 = sadd.s32 %s94, 1
      %p98 = scmp.eq.s32.totalorder %s18, 1
      %p99 = scmp.ne.s32.totalorder %s94, %s96
      %p100 = scmp.eq.s32.totalorder %s18, 0
      %p101 = por %p99, %p100
      %p102 = scmp.ne.s32.totalorder %s94, %s96
      %p103 = scmp.eq.s32.totalorder %s23, 1
      %p104 = por %p102, %p103
      %p105 = scmp.ne.s32.totalorder %s96, %s97
      %p106 = scmp.eq.s32.totalorder %s23, 0
      %p107 = por %p105, %p106
      %p108 = scmp.ne.s32.totalorder %s96, %s97
      %p109 = scmp.eq.s32.totalorder %s24, 1
      %p110 = por %p108, %p109
      %p112 = scmp.ne.s32.totalorder %s97, %s111
      %p113 = scmp.eq.s32.totalorder %s24, 0
      %p114 = por %p112, %p113
      %s116 = sadd.s32 %s115, 1
      %p119 = scmp.eq.s32.totalorder %s18, 1
      %p120 = scmp.ne.s32.totalorder %s115, %s117
      %p121 = scmp.eq.s32.totalorder %s18, 0
      %p122 = por %p120, %p121
      %p123 = scmp.ne.s32.totalorder %s115, %s117
      %p124 = scmp.eq.s32.totalorder %s23, 1
      %p125 = por %p123, %p124
      %p126 = scmp.ne.s32.totalorder %s117, %s118
      %p127 = scmp.eq.s32.totalorder %s23, 0
      %p128 = por %p126, %p127
      %p129 = scmp.ne.s32.totalorder %s117, %s118
      %p130 = scmp.eq.s32.totalorder %s24, 1
      %p131 = por %p129, %p130
      %p133 = scmp.ne.s32.totalorder %s118, %s132
      %p134 = scmp.eq.s32.totalorder %s24, 0
      %p135 = por %p133, %p134
      %s136 = ssub.s32 %s18, %s25
      %p137 = scmp.eq.s32.totalorder %s136, 0
      %s139 = sadd.s32 %s138, 1
      %s140 = scalar_select %p137, %s138, %s139
      %p143 = pneg %p137
      %p144 = scmp.eq.s32.totalorder %s18, 1
      %p145 = por %p143, %p144
      %p146 = scmp.ne.s32.totalorder %s138, %s141
      %p147 = scmp.eq.s32.totalorder %s18, 0
      %p148 = por %p146, %p147
      %p149 = scmp.ne.s32.totalorder %s138, %s141
      %p150 = scmp.eq.s32.totalorder %s23, 1
      %p151 = por %p149, %p150
      %p152 = scmp.ne.s32.totalorder %s141, %s142
      %p153 = scmp.eq.s32.totalorder %s23, 0
      %p154 = por %p152, %p153
      %p155 = scmp.ne.s32.totalorder %s141, %s142
      %p156 = scmp.eq.s32.totalorder %s24, 1
      %p157 = por %p155, %p156
      %p159 = scmp.ne.s32.totalorder %s142, %s158
      %p160 = scmp.eq.s32.totalorder %s24, 0
      %p161 = por %p159, %p160
      %p162 = scmp.le.s32.totalorder 1, %s18
      %p163 = scmp.lt.s32.totalorder %s18, 3
      %p164 = pnand %p162, %p163
      %p165 = pneg %p164
      // Predicated region
      $region9: #{tpu_custom_call.1} parent=5 // pred_check
        _
      $region10: #{tpu_custom_call.1} parent=5 // pred_check_branch
        %167 = sbr.rel (%p164) target = $region12
      $region11: #{tpu_custom_call.1} parent=5 // pred_region
        %s168 = ssub.s32 %s18, 1
        // Predicated region
        $region13: #{tpu_custom_call.1} parent=11 // pred_check
          %p169 = pneg %p65
        $region14: #{tpu_custom_call.1} parent=11 // pred_check_branch
          %171 = sbr.rel (%p169) target = $region16
        $region15: #{tpu_custom_call.1} parent=11 // pred_region
          %173 = vsyncadd [#allocation6], 0
          %s174 = sshll.u32 %s1, 4
          %s175 = int_to_ptr.hbm [resolvable:$true] %s174
          %s176 = sshll.u32 [#allocation5], 4
          %s177 = int_to_ptr.vmem [resolvable:$true] %s176
          %182 = dma.hbm_to_vmem [thread:$0]  %s175, 1024, %s177, [#allocation6], 64, 64, 4
        $region16: #{tpu_custom_call.1} parent=11 // pred_fallthru
          _
        // Predicated region
        $region17: #{tpu_custom_call.1} parent=11 // pred_check
          %p183 = pneg %p86
        $region18: #{tpu_custom_call.1} parent=11 // pred_check_branch
          %185 = sbr.rel (%p183) target = $region20
        $region19: #{tpu_custom_call.1} parent=11 // pred_region
          _
        $region20: #{tpu_custom_call.1} parent=11 // pred_fallthru
          _
        // Predicated region
        $region21: #{tpu_custom_call.1} parent=11 // pred_check
          %p186 = pneg %p107
        $region22: #{tpu_custom_call.1} parent=11 // pred_check_branch
          %188 = sbr.rel (%p186) target = $region24
        $region23: #{tpu_custom_call.1} parent=11 // pred_region
          %190 = vsyncadd [#allocation6], 0
          %s191 = sshll.u32 %s3, 4
          %s192 = int_to_ptr.hbm [resolvable:$true] %s191
          %s193 = sshll.u32 [#allocation7], 4
          %s194 = int_to_ptr.vmem [resolvable:$true] %s193
          %199 = dma.hbm_to_vmem [thread:$0]  %s192, 1024, %s194, [#allocation6], 64, 64, 4
        $region24: #{tpu_custom_call.1} parent=11 // pred_fallthru
          _
        // Predicated region
        $region25: #{tpu_custom_call.1} parent=11 // pred_check
          %p200 = pneg %p128
        $region26: #{tpu_custom_call.1} parent=11 // pred_check_branch
          %202 = sbr.rel (%p200) target = $region28
        $region27: #{tpu_custom_call.1} parent=11 // pred_region
          _
        $region28: #{tpu_custom_call.1} parent=11 // pred_fallthru
          _
      $region12: #{tpu_custom_call.1} parent=5 // pred_fallthru
        _
      %p203 = scmp.lt.s32.totalorder %s18, 2
      // Predicated region
      $region29: #{tpu_custom_call.1} parent=5 // pred_check
        %p204 = pneg %p203
      $region30: #{tpu_custom_call.1} parent=5 // pred_check_branch
        %206 = sbr.rel (%p204) target = $region32
      $region31: #{tpu_custom_call.1} parent=5 // pred_region
        // Predicated region
        $region33: #{tpu_custom_call.1} parent=31 // pred_check
          %p207 = pneg %p38
        $region34: #{tpu_custom_call.1} parent=31 // pred_check_branch
          %209 = sbr.rel (%p207) target = $region36
        $region35: #{tpu_custom_call.1} parent=31 // pred_region
          #allocation10 [shape = 'u32[6]{0}', space=smem, size = 0x18, scoped, tag = 'DMA stride descriptor']
          %s210 = sand.u32 %s28, 1
          %s211 = scalar_lea.sflag [#allocation3], %s210
          %s212 = sand.u32 %s28, 1
          %s213 = smul.addr %s212, 16
          %s214 = scalar_lea.vmem [#allocation2], %s213
          %s215 = smul.u32 2, %s18
          %217 = vsyncadd %s211, 0
          %s218 = smul.addr %s215, 4
          %s219 = scalar_lea.hbm %s0, %s218
          %s221 = sshll.u32 1, 14
          %s222 = sxor.u32 4294967295, %s221
          %s224 = sld [smem:[#allocation0]]
          %s225 = sadd.s32 2, %s224
          %s227 = sshll.u32 7, 26
          %s228 = sxor.u32 4294967295, %s227
          %s229 = sand.u32 0, %s228
          %s230 = sshll.u32 %s225, 26
          %s231 = sor.u32 %s229, %s230
          %s232 = sshll.u32 %s219, 4
          %s233 = int_to_ptr.hbm [resolvable:$true] %s232
          %s234 = sshll.u32 %s214, 4
          %s235 = int_to_ptr.vmem [resolvable:$true] %s234
          %241 = sst [smem:[#allocation10]] 256
          %s242 = scalar_lea.smem [#allocation10], 1
          %243 = sst [smem:[%s242]] 128
          %s244 = scalar_lea.smem [#allocation10], 2
          %245 = sst [smem:[%s244]] 2
          %s246 = scalar_lea.smem [#allocation10], 3
          %247 = sst [smem:[%s246]] 64
          %s248 = scalar_lea.smem [#allocation10], 4
          %249 = sst [smem:[%s248]] 64
          %s250 = scalar_lea.smem [#allocation10], 5
          %251 = sst [smem:[%s250]] 4
          %253 = dma.general %s233, 256, %s235, %s211, [#allocation9], [#allocation10], %s231, 0
        $region36: #{tpu_custom_call.1} parent=31 // pred_fallthru
          _
      $region32: #{tpu_custom_call.1} parent=5 // pred_fallthru
        _
      %p254 = scmp.le.s32.totalorder 1, %s18
      %p255 = scmp.lt.s32.totalorder %s18, 3
      %p256 = pnand %p254, %p255
      %p257 = pneg %p256
      // Predicated region
      $region37: #{tpu_custom_call.1} parent=5 // pred_check
        _
      $region38: #{tpu_custom_call.1} parent=5 // pred_check_branch
        %259 = sbr.rel (%p256) target = $region40
      $region39: #{tpu_custom_call.1} parent=5 // pred_region
        %s260 = ssub.s32 %s18, 1
        %s261 = sand.u32 %s31, 1
        %s262 = scalar_lea.sflag [#allocation3], %s261
        %s263 = sand.u32 %s31, 1
        %s264 = smul.addr %s263, 16
        %s265 = scalar_lea.vmem [#allocation2], %s264
        // Predicated region
        $region41: #{tpu_custom_call.1} parent=39 // pred_check
          %p266 = pneg %p44
        $region42: #{tpu_custom_call.1} parent=39 // pred_check_branch
          %268 = sbr.rel (%p266) target = $region44
        $region43: #{tpu_custom_call.1} parent=39 // pred_region
          %270 = dma.done %s262, 256
        $region44: #{tpu_custom_call.1} parent=39 // pred_fallthru
          _
        // Predicated region
        $region45: #{tpu_custom_call.1} parent=39 // pred_check
          %p271 = pneg %p65
        $region46: #{tpu_custom_call.1} parent=39 // pred_check_branch
          %273 = sbr.rel (%p271) target = $region48
        $region47: #{tpu_custom_call.1} parent=39 // pred_region
          %275 = dma.done [#allocation6], 1024
        $region48: #{tpu_custom_call.1} parent=39 // pred_fallthru
          _
        // Predicated region
        $region49: #{tpu_custom_call.1} parent=39 // pred_check
          %p276 = pneg %p107
        $region50: #{tpu_custom_call.1} parent=39 // pred_check_branch
          %278 = sbr.rel (%p276) target = $region52
        $region51: #{tpu_custom_call.1} parent=39 // pred_region
          %280 = dma.done [#allocation6], 1024
        $region52: #{tpu_custom_call.1} parent=39 // pred_fallthru
          _
        %s281 = sand.u32 %s31, 1
        %s282 = scalar_lea.sflag [#allocation3], %s281
        %s283 = sand.u32 %s31, 1
        %s284 = smul.addr %s283, 16
        %s285 = scalar_lea.vmem [#allocation2], %s284
        %p286 = pneg %p44
        %p287 = pneg %p41
        %p288 = pneg %p65
        %p289 = pneg %p62
        %p290 = pneg %p86
        %p291 = pneg %p83
        %p292 = pneg %p107
        %p293 = pneg %p104
        %p294 = pneg %p128
        %p295 = pneg %p125
        %p296 = pneg %p154
        %p297 = pneg %p151
        %s298 = sand.u32 %s141, 1
        %s299 = scalar_lea.sflag [#allocation4], %s298
        %s300 = sand.u32 %s141, 1
        %s301 = smul.addr %s300, 16
        %s302 = scalar_lea.vmem [#allocation8], %s301
        %s303 = smul.u32 2, %s23
        %s304 = smul.u32 2, %s23
        %v305 = vld [vmem:[%s265] sm:$0xf]
        %v306 = vld [vmem:[%s265 + $0x4] sm:$0xf]
        %s307 = scalar_lea.vmem %s265, 8 [#allocation2]
        %v308 = vld [vmem:[%s307] sm:$0xf]
        %v309 = vld [vmem:[%s307 + $0x4] sm:$0xf]
        %v312 = vunpack.c.l.b16 %v305
        %v313 = vunpack.c.l.b16 %v306
        %v314 = vpack.c.b16 %v313, %v312
        %v318 = vunpack.c.l.b16 %v308
        %v319 = vunpack.c.l.b16 %v309
        %v320 = vpack.c.b16 %v319, %v318
        %v322 = vld [vmem:[#allocation5] sm:$0xf]
        %v323 = vld [vmem:[#allocation5 + $0x4] sm:$0xf]
        %v324 = vld [vmem:[#allocation5 + $0x8] sm:$0xf]
        %v325 = vld [vmem:[#allocation5 + $0xc] sm:$0xf]
        %v326 = vld [vmem:[#allocation5 + $0x10] sm:$0xf]
        %v327 = vld [vmem:[#allocation5 + $0x14] sm:$0xf]
        %v328 = vld [vmem:[#allocation5 + $0x18] sm:$0xf]
        %v329 = vld [vmem:[#allocation5 + $0x1c] sm:$0xf]
        %v330 = vld [vmem:[#allocation5 + $0x20] sm:$0xf]
        %v331 = vld [vmem:[#allocation5 + $0x24] sm:$0xf]
        %v332 = vld [vmem:[#allocation5 + $0x28] sm:$0xf]
        %v333 = vld [vmem:[#allocation5 + $0x2c] sm:$0xf]
        %v334 = vld [vmem:[#allocation5 + $0x30] sm:$0xf]
        %v335 = vld [vmem:[#allocation5 + $0x34] sm:$0xf]
        %v336 = vld [vmem:[#allocation5 + $0x38] sm:$0xf]
        %v337 = vld [vmem:[#allocation5 + $0x3c] sm:$0xf]
        %v338 = vld [vmem:[%s2] sm:$0x1]
        %v340 = vperm.slane %v338, 0
        %v358 = vunpack.c.l.b16 %v322
        %v359 = vunpack.c.l.b16 %v323
        %v360 = vunpack.c.l.b16 %v324
        %v361 = vunpack.c.l.b16 %v325
        %v362 = vunpack.c.l.b16 %v326
        %v363 = vunpack.c.l.b16 %v327
        %v364 = vunpack.c.l.b16 %v328
        %v365 = vunpack.c.l.b16 %v329
        %v366 = vunpack.c.l.b16 %v330
        %v367 = vunpack.c.l.b16 %v331
        %v368 = vunpack.c.l.b16 %v332
        %v369 = vunpack.c.l.b16 %v333
        %v370 = vunpack.c.l.b16 %v334
        %v371 = vunpack.c.l.b16 %v335
        %v372 = vunpack.c.l.b16 %v336
        %v373 = vunpack.c.l.b16 %v337
        %v374 = vpack.c.b16 %v359, %v358
        %v375 = vpack.c.b16 %v361, %v360
        %v376 = vpack.c.b16 %v363, %v362
        %v377 = vpack.c.b16 %v365, %v364
        %v378 = vpack.c.b16 %v367, %v366
        %v379 = vpack.c.b16 %v369, %v368
        %v380 = vpack.c.b16 %v371, %v370
        %v381 = vpack.c.b16 %v373, %v372
        %390 = vmatpush.bf16.msra.mxu0 %v381
        %391 = vmatpush.bf16.msra.mxu0 %v380
        %392 = vmatpush.bf16.msra.mxu0 %v379
        %393 = vmatpush.bf16.msra.mxu0 %v378
        %394 = vmatpush.bf16.msra.mxu0 %v377
        %395 = vmatpush.bf16.msra.mxu0 %v376
        %396 = vmatpush.bf16.msra.mxu0 %v375
        %397 = vmatpush.bf16.msra.mxu0 %v374
        %398 = vmatmul.bf16.gmra.mxu0 %v314
        %v399 = vpop.f32.mrf.mxu0
        %v400 = vadd.f32 %v340, %v399
        %v401 = vpop.f32.mrf.mxu0
        %v402 = vadd.f32 %v340, %v401
        %403 = vmatmul.bf16.gmra.mxu0 %v320
        %v404 = vpop.f32.mrf.mxu0
        %v405 = vadd.f32 %v340, %v404
        %v406 = vpop.f32.mrf.mxu0
        %v407 = vadd.f32 %v340, %v406
        %408 = vdwg.mxu0
        %v409 = vtanh.pop %v400
        %v410 = vtanh.pop %v402
        %v411 = vtanh.pop %v405
        %v412 = vtanh.pop %v407
        %v413 = vpack.c.bf16 %v410, %v409
        %v414 = vpack.c.bf16 %v412, %v411
        %v415 = vld [vmem:[#allocation7] sm:$0xf]
        %v416 = vld [vmem:[#allocation7 + $0x4] sm:$0xf]
        %v417 = vld [vmem:[#allocation7 + $0x8] sm:$0xf]
        %v418 = vld [vmem:[#allocation7 + $0xc] sm:$0xf]
        %v419 = vld [vmem:[#allocation7 + $0x10] sm:$0xf]
        %v420 = vld [vmem:[#allocation7 + $0x14] sm:$0xf]
        %v421 = vld [vmem:[#allocation7 + $0x18] sm:$0xf]
        %v422 = vld [vmem:[#allocation7 + $0x1c] sm:$0xf]
        %v423 = vld [vmem:[#allocation7 + $0x20] sm:$0xf]
        %v424 = vld [vmem:[#allocation7 + $0x24] sm:$0xf]
        %v425 = vld [vmem:[#allocation7 + $0x28] sm:$0xf]
        %v426 = vld [vmem:[#allocation7 + $0x2c] sm:$0xf]
        %v427 = vld [vmem:[#allocation7 + $0x30] sm:$0xf]
        %v428 = vld [vmem:[#allocation7 + $0x34] sm:$0xf]
        %v429 = vld [vmem:[#allocation7 + $0x38] sm:$0xf]
        %v430 = vld [vmem:[#allocation7 + $0x3c] sm:$0xf]
        %v431 = vld [vmem:[%s4] sm:$0x1]
        %v433 = vperm.slane %v431, 0
        %v451 = vunpack.c.l.b16 %v415
        %v452 = vunpack.c.l.b16 %v416
        %v453 = vunpack.c.l.b16 %v417
        %v454 = vunpack.c.l.b16 %v418
        %v455 = vunpack.c.l.b16 %v419
        %v456 = vunpack.c.l.b16 %v420
        %v457 = vunpack.c.l.b16 %v421
        %v458 = vunpack.c.l.b16 %v422
        %v459 = vunpack.c.l.b16 %v423
        %v460 = vunpack.c.l.b16 %v424
        %v461 = vunpack.c.l.b16 %v425
        %v462 = vunpack.c.l.b16 %v426
        %v463 = vunpack.c.l.b16 %v427
        %v464 = vunpack.c.l.b16 %v428
        %v465 = vunpack.c.l.b16 %v429
        %v466 = vunpack.c.l.b16 %v430
        %v467 = vpack.c.b16 %v452, %v451
        %v468 = vpack.c.b16 %v454, %v453
        %v469 = vpack.c.b16 %v456, %v455
        %v470 = vpack.c.b16 %v458, %v457
        %v471 = vpack.c.b16 %v460, %v459
        %v472 = vpack.c.b16 %v462, %v461
        %v473 = vpack.c.b16 %v464, %v463
        %v474 = vpack.c.b16 %v466, %v465
        %483 = vmatpush.bf16.msra.mxu0 %v474
        %484 = vmatpush.bf16.msra.mxu0 %v473
        %485 = vmatpush.bf16.msra.mxu0 %v472
        %486 = vmatpush.bf16.msra.mxu0 %v471
        %487 = vmatpush.bf16.msra.mxu0 %v470
        %488 = vmatpush.bf16.msra.mxu0 %v469
        %489 = vmatpush.bf16.msra.mxu0 %v468
        %490 = vmatpush.bf16.msra.mxu0 %v467
        %491 = vmatmul.bf16.gmra.mxu0 %v413
        %v492 = vpop.f32.mrf.mxu0
        %v493 = vadd.f32 %v433, %v492
        %v494 = vpop.f32.mrf.mxu0
        %v495 = vadd.f32 %v433, %v494
        %496 = vmatmul.bf16.gmra.mxu0 %v414
        %v497 = vpop.f32.mrf.mxu0
        %v498 = vadd.f32 %v433, %v497
        %v499 = vpop.f32.mrf.mxu0
        %v500 = vadd.f32 %v433, %v499
        %501 = vdwg.mxu0
        %vm502 = vcmask 15360
        %v503 = vsel %vm502, %v493, -inf
        %504 = vmax.xlane.f32.xlu0 %v503
        %v505 = vpop.xlane.xlu0 %504
        %v506 = vsel %vm502, %v495, -inf
        %507 = vmax.xlane.f32.xlu0 %v506
        %v508 = vpop.xlane.xlu0 %507
        %v509 = vsub.f32 %v493, %v505
        %v510 = vsub.f32 %v495, %v508
        %v511 = vmul.f32 %v509, 1.442695
        %v512 = vpow.pop %v511
        %v513 = vmul.f32 %v510, 1.442695
        %v514 = vpow.pop %v513
        %v515 = vsel %vm502, %v512, 0.0
        %516 = vadd.xlane.f32.xlu0 %v515
        %v517 = vpop.xlane.xlu0 %516
        %v518 = vsel %vm502, %v514, 0.0
        %519 = vadd.xlane.f32.xlu0 %v518
        %v520 = vpop.xlane.xlu0 %519
        %v521 = vrcp.pop %v517
        %v522 = vmul.f32 %v517, %v521
        %v523 = vsub.f32 1.0, %v522
        %v524 = vmul.f32 %v521, %v523
        %v525 = vadd.f32 %v521, %v524
        %vm526 = vweird.f32 %v517
        %vm527 = vweird.f32 %v521
        %vm528 = vmor %vm526, %vm527
        %v529 = vsel %vm528, %v521, %v525
        %v530 = vand.u32 2147483647, %v517
        %vm531 = vcmp.eq.f32.partialorder %v530, 8.507059e+37
        %v532 = vand.u32 %v517, 2147483648
        %v533 = vor.u32 1.1754944e-38, %v532
        %v534 = vsel %vm531, %v533, %v529
        %v535 = vmul.f32 %v512, %v534
        %v536 = vrcp.pop %v520
        %v537 = vmul.f32 %v520, %v536
        %v538 = vsub.f32 1.0, %v537
        %v539 = vmul.f32 %v536, %v538
        %v540 = vadd.f32 %v536, %v539
        %vm541 = vweird.f32 %v520
        %vm542 = vweird.f32 %v536
        %vm543 = vmor %vm541, %vm542
        %v544 = vsel %vm543, %v536, %v540
        %v545 = vand.u32 2147483647, %v520
        %vm546 = vcmp.eq.f32.partialorder %v545, 8.507059e+37
        %v547 = vand.u32 %v520, 2147483648
        %v548 = vor.u32 1.1754944e-38, %v547
        %v549 = vsel %vm546, %v548, %v544
        %v550 = vmul.f32 %v514, %v549
        %v551 = vsel %vm502, %v498, -inf
        %552 = vmax.xlane.f32.xlu0 %v551
        %v553 = vpop.xlane.xlu0 %552
        %v554 = vsel %vm502, %v500, -inf
        %555 = vmax.xlane.f32.xlu0 %v554
        %v556 = vpop.xlane.xlu0 %555
        %v557 = vsub.f32 %v498, %v553
        %v558 = vsub.f32 %v500, %v556
        %v559 = vmul.f32 %v557, 1.442695
        %v560 = vpow.pop %v559
        %v561 = vmul.f32 %v558, 1.442695
        %v562 = vpow.pop %v561
        %v563 = vsel %vm502, %v560, 0.0
        %564 = vadd.xlane.f32.xlu0 %v563
        %v565 = vpop.xlane.xlu0 %564
        %v566 = vsel %vm502, %v562, 0.0
        %567 = vadd.xlane.f32.xlu0 %v566
        %v568 = vpop.xlane.xlu0 %567
        %v569 = vrcp.pop %v565
        %v570 = vmul.f32 %v565, %v569
        %v571 = vsub.f32 1.0, %v570
        %v572 = vmul.f32 %v569, %v571
        %v573 = vadd.f32 %v569, %v572
        %vm574 = vweird.f32 %v565
        %vm575 = vweird.f32 %v569
        %vm576 = vmor %vm574, %vm575
        %v577 = vsel %vm576, %v569, %v573
        %v578 = vand.u32 2147483647, %v565
        %vm579 = vcmp.eq.f32.partialorder %v578, 8.507059e+37
        %v580 = vand.u32 %v565, 2147483648
        %v581 = vor.u32 1.1754944e-38, %v580
        %v582 = vsel %vm579, %v581, %v577
        %v583 = vmul.f32 %v560, %v582
        %v584 = vrcp.pop %v568
        %v585 = vmul.f32 %v568, %v584
        %v586 = vsub.f32 1.0, %v585
        %v587 = vmul.f32 %v584, %v586
        %v588 = vadd.f32 %v584, %v587
        %vm589 = vweird.f32 %v568
        %vm590 = vweird.f32 %v584
        %vm591 = vmor %vm589, %vm590
        %v592 = vsel %vm591, %v584, %v588
        %v593 = vand.u32 2147483647, %v568
        %vm594 = vcmp.eq.f32.partialorder %v593, 8.507059e+37
        %v595 = vand.u32 %v568, 2147483648
        %v596 = vor.u32 1.1754944e-38, %v595
        %v597 = vsel %vm594, %v596, %v592
        %v598 = vmul.f32 %v562, %v597
        %599 = vst [vmem:[%s302] sm:$0xff] 0.0
        %600 = vst [vmem:[%s302 + $0x8] sm:$0xff] 0.0
        %601 = vst.msk [vmem:[%s302] sm:$0xff] %vm502, %v535
        %602 = vst.msk [vmem:[%s302 + $0x8] sm:$0xff] %vm502, %v550
        %605 = vrot.lane.b32.xlu0 %v583, 2
        %v606 = vpop.permute.xlu0 %605
        %607 = vrot.lane.b32.xlu0 %v598, 2
        %v608 = vpop.permute.xlu0 %607
        %vm611 = vcmask 31760
        %612 = vst.msk [vmem:[%s302] sm:$0xff] %vm611, %v606
        %613 = vst.msk [vmem:[%s302 + $0x8] sm:$0xff] %vm611, %v608
        %vm614 = vcmask 39968
        %615 = vst.msk [vmem:[%s302] sm:$0xff] %vm614, 1.0
        %616 = vst.msk [vmem:[%s302 + $0x8] sm:$0xff] %vm614, 1.0
        %s617 = sand.u32 %s141, 1
        %s618 = scalar_lea.sflag [#allocation4], %s617
        %s619 = sand.u32 %s141, 1
        %s620 = smul.addr %s619, 16
        %s621 = scalar_lea.vmem [#allocation8], %s620
        // Predicated region
        $region53: #{tpu_custom_call.1} parent=39 // pred_check
          %p622 = pneg %p151
        $region54: #{tpu_custom_call.1} parent=39 // pred_check_branch
          %624 = sbr.rel (%p622) target = $region56
        $region55: #{tpu_custom_call.1} parent=39 // pred_region
          %s625 = smul.u32 2, %s23
          %627 = vsyncadd %s618, 0
          %s628 = smul.addr %s625, 8
          %s629 = scalar_lea.hbm %s5, %s628
          %s630 = sshll.u32 %s621, 4
          %s631 = int_to_ptr.vmem [resolvable:$true] %s630
          %s632 = sshll.u32 %s629, 4
          %s633 = int_to_ptr.hbm [resolvable:$true] %s632
          %638 = dma.vmem_to_hbm [thread:$0]  %s631, 256, %s633, %s618, 128, 128, 8
        $region56: #{tpu_custom_call.1} parent=39 // pred_fallthru
          _
      $region40: #{tpu_custom_call.1} parent=5 // pred_fallthru
        _
      %p639 = scmp.le.s32.totalorder 2, %s18
      // Predicated region
      $region57: #{tpu_custom_call.1} parent=5 // pred_check
        %p640 = pneg %p639
      $region58: #{tpu_custom_call.1} parent=5 // pred_check_branch
        %642 = sbr.rel (%p640) target = $region60
      $region59: #{tpu_custom_call.1} parent=5 // pred_region
        %s643 = ssub.s32 %s18, 2
        // Predicated region
        $region61: #{tpu_custom_call.1} parent=59 // pred_check
          %p644 = pneg %p157
        $region62: #{tpu_custom_call.1} parent=59 // pred_check_branch
          %646 = sbr.rel (%p644) target = $region64
        $region63: #{tpu_custom_call.1} parent=59 // pred_region
          %s647 = sand.u32 %s142, 1
          %s648 = scalar_lea.sflag [#allocation4], %s647
          %s649 = sand.u32 %s142, 1
          %s650 = smul.addr %s649, 16
          %s651 = scalar_lea.vmem [#allocation8], %s650
          %653 = dma.done %s648, 256
        $region64: #{tpu_custom_call.1} parent=59 // pred_fallthru
          _
      $region60: #{tpu_custom_call.1} parent=5 // pred_fallthru
        _
    $region6: #{tpu_custom_call.1} parent=1 // loop_footer
      %s22 = sadd.s32 1, %s18
    $region7: #{tpu_custom_call.1} parent=1 // loop_footer_branch
      %17 = sbr.rel target = $region3
    $region8: #{tpu_custom_call.1} parent=1 // loop_exit
      _
    %654 = vsyncpa [#allocation3], 1
    %s655 = scalar_lea.sflag [#allocation3], 1
    %656 = vsyncpa %s655, 1
    %657 = vsyncpa [#allocation6], 1
    %658 = vsyncpa [#allocation4], 1
    %s659 = scalar_lea.sflag [#allocation4], 1
    %660 = vsyncpa %s659, 1

</llo_original>
